<compile_context>
chip_gen: v6e
topology: v6e:2x2x1
jax: 0.10.0
libtpu: 0.0.40
codegen_flags: <defaults>
</compile_context>

<pallas_src>
import functools

import jax
import jax.numpy as jnp
from jax.experimental import pallas as pl
from jax.experimental.pallas import tpu as pltpu


def _cdiv(a, b):
    return -(-a // b)


def _round_up(x, m):
    return ((x + m - 1) // m) * m


# --------------------------------------------------------------------------
# Shared wrapper-side per-row precomputation (tiny O(N) int work).
# --------------------------------------------------------------------------
def _prep_row_side(align, target, *, vocab_size, force_copy, unk_index,
                   ignore_index):
    tgt = target.astype(jnp.int32)
    aln = align.astype(jnp.int32)
    copy_col = aln + jnp.int32(vocab_size)
    non_copy = aln == unk_index
    if not force_copy:
        non_copy = non_copy | (tgt != unk_index)
    ign = (tgt == ignore_index).astype(jnp.int32)
    return tgt, aln, copy_col, non_copy, ign


# --------------------------------------------------------------------------
# Path 1: DMA-gather kernel (scores stay in HBM; only needed strips touched).
# --------------------------------------------------------------------------
def _know_gen_gather_kernel(tgt_blk_ref, copy_blk_ref,            # SMEM (N,)
                            tgt_lane_ref, copy_lane_ref, ign_ref,  # (tile_n,1)
                            scores_hbm,                            # (N,V) HBM
                            loss_ref,                              # (tile_n,1)
                            tbuf, cbuf, sem, *, tile_n, n_rows, eps):
    i = pl.program_id(0)
    row0 = i * tile_n
    n_valid = jnp.minimum(tile_n, n_rows - row0)

    @pl.loop(0, n_valid)
    def _issue(r):
        row = row0 + r
        t_start = pl.multiple_of(tgt_blk_ref[row], 128)
        c_start = pl.multiple_of(copy_blk_ref[row], 128)
        pltpu.make_async_copy(
            scores_hbm.at[pl.ds(row, 1), pl.ds(t_start, 128)],
            tbuf.at[pl.ds(r, 1), :], sem.at[0]).start()
        pltpu.make_async_copy(
            scores_hbm.at[pl.ds(row, 1), pl.ds(c_start, 128)],
            cbuf.at[pl.ds(r, 1), :], sem.at[1]).start()

    @pl.loop(0, n_valid)
    def _wait(r):
        # Descriptors only provide shape/byte-count for the semaphore waits.
        pltpu.make_async_copy(
            scores_hbm.at[pl.ds(0, 1), pl.ds(0, 128)],
            tbuf.at[pl.ds(r, 1), :], sem.at[0]).wait()
        pltpu.make_async_copy(
            scores_hbm.at[pl.ds(0, 1), pl.ds(0, 128)],
            cbuf.at[pl.ds(r, 1), :], sem.at[1]).wait()

    lanes = jax.lax.broadcasted_iota(jnp.int32, (tile_n, 128), 1)
    t = tbuf[...]
    c = cbuf[...]
    zero = jnp.zeros((), t.dtype)
    sel = (jnp.where(lanes == tgt_lane_ref[...], t, zero)
           + jnp.where(lanes == copy_lane_ref[...], c, zero))
    tot = jnp.sum(sel.astype(jnp.float32), axis=1, keepdims=True)
    loss = -jnp.log(tot + eps)
    loss_ref[...] = jnp.where(ign_ref[...] != 0, 0.0, loss)


def _know_gen_loss_gather(scores, align, target, *, vocab_size, force_copy,
                          unk_index, ignore_index, eps, tile_n,
                          vmem_limit_bytes):
    N, V = scores.shape

    if tile_n is None:
        tile_n = min(256, _round_up(N, 8))
        if N > 8:  # keep >=2 row blocks so v7x's two TensorCores both get work
            tile_n = min(tile_n, _round_up(_cdiv(N, 2), 8))
        tile_n = max(8, (tile_n // 8) * 8)
    assert tile_n % 8 == 0, "tile_n must be a multiple of 8"

    tgt, aln, copy_col, non_copy, ign = _prep_row_side(
        align, target, vocab_size=vocab_size, force_copy=force_copy,
        unk_index=unk_index, ignore_index=ignore_index)

    tgt_blk = (tgt // 128) * 128        # (N,) int32, 128-aligned, in-bounds
    copy_blk = (copy_col // 128) * 128  # (V % 128 == 0 guaranteed by caller)
    # Fold conditions into the local lane index (-1 => never selected).
    tgt_lane = jnp.where(non_copy, tgt - tgt_blk, -1).reshape(N, 1)
    copy_lane = jnp.where(aln == unk_index, -1,
                          copy_col - copy_blk).reshape(N, 1)
    ign2 = ign.reshape(N, 1)

    kernel = functools.partial(_know_gen_gather_kernel, tile_n=tile_n,
                               n_rows=N, eps=eps)
    grid = (_cdiv(N, tile_n),)

    loss2 = pl.pallas_call(
        kernel,
        out_shape=jax.ShapeDtypeStruct((N, 1), jnp.float32),
        grid_spec=pltpu.PrefetchScalarGridSpec(
            num_scalar_prefetch=2,
            grid=grid,
            in_specs=[
                pl.BlockSpec((tile_n, 1), lambda i, tb, cb: (i, 0)),
                pl.BlockSpec((tile_n, 1), lambda i, tb, cb: (i, 0)),
                pl.BlockSpec((tile_n, 1), lambda i, tb, cb: (i, 0)),
                pl.BlockSpec(memory_space=pl.ANY),   # scores stay in HBM
            ],
            out_specs=pl.BlockSpec((tile_n, 1), lambda i, tb, cb: (i, 0)),
            scratch_shapes=[
                pltpu.VMEM((tile_n, 128), scores.dtype),
                pltpu.VMEM((tile_n, 128), scores.dtype),
                pltpu.SemaphoreType.DMA((2,)),
            ],
        ),
        compiler_params=pltpu.CompilerParams(
            dimension_semantics=("parallel",),
            vmem_limit_bytes=vmem_limit_bytes),
    )(tgt_blk, copy_blk, tgt_lane, copy_lane, ign2, scores)
    return loss2.reshape(N)


# --------------------------------------------------------------------------
# Path 2: streaming kernel (fallback), with the in-kernel VPU optimizations.
# --------------------------------------------------------------------------
def _know_gen_stream_kernel(copy_cmp_ref, tgt_cmp_ref, ign_ref, scores_ref,
                            loss_ref, acc_ref, *, tile_v, acc_lanes, eps):
    j = pl.program_id(1)

    @pl.when(j == 0)
    def _init():
        acc_ref[...] = jnp.zeros_like(acc_ref)

    s = scores_ref[...]                                    # native dtype
    lanes = jax.lax.broadcasted_iota(jnp.int32, s.shape, 1)  # loop-invariant
    shift = j * tile_v
    c_cmp = copy_cmp_ref[...] - shift                      # (tile_n, 1)
    t_cmp = tgt_cmp_ref[...] - shift
    zero = jnp.zeros((), s.dtype)
    # Two separate selects + add preserve the reference's double-count when
    # target == align + vocab_size.  Disabled rows carry a -1 sentinel, so no
    # extra full-width AND masks are needed.
    contrib = (jnp.where(lanes == c_cmp, s, zero)
               + jnp.where(lanes == t_cmp, s, zero))

    if acc_lanes == 128:
        # Deferred reduction: lane-dense f32 accumulator fed by VALU strip
        # adds; the cross-lane reduce happens once, in the finalize.
        part = contrib[:, 0:128]
        for t in range(1, tile_v // 128):
            part = part + contrib[:, t * 128:(t + 1) * 128]
        acc_ref[...] += part.astype(jnp.float32)
    else:
        acc_ref[...] += jnp.sum(contrib.astype(jnp.float32), axis=1,
                                keepdims=True)

    @pl.when(j == pl.num_programs(1) - 1)
    def _finalize():
        if acc_lanes == 128:
            tot = jnp.sum(acc_ref[...], axis=1, keepdims=True)
        else:
            tot = acc_ref[...]
        loss = -jnp.log(tot + eps)
        loss_ref[...] = jnp.where(ign_ref[...] != 0, 0.0, loss)


def _know_gen_loss_stream(scores, align, target, *, vocab_size, force_copy,
                          unk_index, ignore_index, eps, tile_n, tile_v,
                          vmem_limit_bytes):
    N, V = scores.shape
    itemsize = jnp.dtype(scores.dtype).itemsize

    # ---- tile sizing -------------------------------------------------------
    target_block_bytes = 8 * 1024 * 1024
    if tile_v is None:
        # Prefer full-row blocks (single contiguous DMA, vocab axis == 1).
        if V <= 2048 or V * 8 * itemsize <= target_block_bytes:
            tile_v = V
        else:
            tile_v = 2048
    assert tile_v == V or tile_v % 128 == 0, "tile_v must be V or mult of 128"

    if tile_n is None:
        tile_n = max(8, target_block_bytes // max(1, tile_v * itemsize))
        tile_n = min(tile_n, 1024, _round_up(N, 8))
        if N > 8:  # >=2 row blocks -> both v7x TensorCores get work
            tile_n = min(tile_n, _round_up(_cdiv(N, 2), 8))
        tile_n = max(8, (tile_n // 8) * 8)
    assert tile_n % 8 == 0, "tile_n must be a multiple of 8"

    acc_lanes = 128 if (tile_v % 128 == 0 and tile_v >= 128) else 1

    tgt, aln, copy_col, non_copy, ign = _prep_row_side(
        align, target, vocab_size=vocab_size, force_copy=force_copy,
        unk_index=unk_index, ignore_index=ignore_index)
    copy_cmp = jnp.where(aln == unk_index, -1, copy_col).reshape(N, 1)
    tgt_cmp = jnp.where(non_copy, tgt, -1).reshape(N, 1)
    ign2 = ign.reshape(N, 1)

    grid = (_cdiv(N, tile_n), _cdiv(V, tile_v))
    kernel = functools.partial(_know_gen_stream_kernel, tile_v=tile_v,
                               acc_lanes=acc_lanes, eps=eps)

    loss2 = pl.pallas_call(
        kernel,
        out_shape=jax.ShapeDtypeStruct((N, 1), jnp.float32),
        grid_spec=pltpu.PrefetchScalarGridSpec(
            num_scalar_prefetch=0,
            grid=grid,
            in_specs=[
                pl.BlockSpec((tile_n, 1), lambda i, j: (i, 0)),
                pl.BlockSpec((tile_n, 1), lambda i, j: (i, 0)),
                pl.BlockSpec((tile_n, 1), lambda i, j: (i, 0)),
                pl.BlockSpec((tile_n, tile_v), lambda i, j: (i, j)),
            ],
            out_specs=pl.BlockSpec((tile_n, 1), lambda i, j: (i, 0)),
            scratch_shapes=[pltpu.VMEM((tile_n, acc_lanes), jnp.float32)],
        ),
        compiler_params=pltpu.CompilerParams(
            dimension_semantics=("parallel", "arbitrary"),
            vmem_limit_bytes=vmem_limit_bytes),
    )(copy_cmp, tgt_cmp, ign2, scores)
    return loss2.reshape(N)


# --------------------------------------------------------------------------
# Public wrapper.
# --------------------------------------------------------------------------
def know_generator_loss(scores, align, target, *, vocab_size, force_copy,
                        unk_index=0, ignore_index=-100, eps=1e-20,
                        tile_n=None, tile_v=None, use_gather=None,
                        vmem_limit_bytes=48 * 1024 * 1024):
    """Forward of KnowGeneratorLoss.

    scores: (N, V) float array (f32 or bf16).  align, target: (N,) ints.
    Returns loss: (N,) float32.
    """
    N, V = scores.shape
    itemsize = jnp.dtype(scores.dtype).itemsize
    gather_ok = (V % 128 == 0) and (V >= 128) and (itemsize == 4)
    if use_gather is None:
        use_gather = gather_ok and V >= 512
    if use_gather:
        if not gather_ok:
            raise ValueError(
                "DMA-gather path requires V % 128 == 0 and a 32-bit dtype")
        return _know_gen_loss_gather(
            scores, align, target, vocab_size=vocab_size,
            force_copy=force_copy, unk_index=unk_index,
            ignore_index=ignore_index, eps=eps, tile_n=tile_n,
            vmem_limit_bytes=vmem_limit_bytes)
    return _know_gen_loss_stream(
        scores, align, target, vocab_size=vocab_size, force_copy=force_copy,
        unk_index=unk_index, ignore_index=ignore_index, eps=eps,
        tile_n=tile_n, tile_v=tile_v, vmem_limit_bytes=vmem_limit_bytes)


def _reference(scores, align, target, *, vocab_size, force_copy,
               unk_index=0, ignore_index=-100, eps=1e-20):
    """Pure-JAX reference mirroring the PyTorch forward."""
    n = scores.shape[0]
    rows = jnp.arange(n)
    vocab_probs = scores[rows, target]
    copy_tok_probs = scores[rows, align + vocab_size]
    copy_tok_probs = jnp.where(align == unk_index, 0.0, copy_tok_probs)
    copy_tok_probs = copy_tok_probs + eps
    non_copy = align == unk_index
    if not force_copy:
        non_copy = non_copy | (target != unk_index)
    probs = jnp.where(non_copy, copy_tok_probs + vocab_probs, copy_tok_probs)
    loss = -jnp.log(probs)
    return jnp.where(target == ignore_index, 0.0, loss)


if __name__ == "__main__":
    eps = 1e-20

    # ---------- Test A: small default shapes -> streaming path (V=48) ------
    vocab_size, copy_vocab = 32, 16
    batch, tgt_len = 2, 8
    N, V = batch * tgt_len, vocab_size + copy_vocab
    key = jax.random.PRNGKey(0)
    k1, k2, k3 = jax.random.split(key, 3)
    scores = jax.nn.softmax(jax.random.normal(k1, (N, V), jnp.float32), -1)
    target = jax.random.randint(k2, (N,), 0, vocab_size, dtype=jnp.int32)
    align = jax.random.randint(k3, (N,), 0, copy_vocab, dtype=jnp.int32)

    out = know_generator_loss(scores, align, target, vocab_size=vocab_size,
                              force_copy=False, eps=eps)
    out = jax.block_until_ready(out)
    ref = _reference(scores, align, target, vocab_size=vocab_size,
                     force_copy=False, eps=eps)
    assert out.shape == (N,)
    assert jnp.allclose(out, ref, rtol=1e-5, atol=1e-5)

    # bf16 scores (streamed uncast; native-dtype selects, f32 accumulation).
    out_b = know_generator_loss(scores.astype(jnp.bfloat16), align, target,
                                vocab_size=vocab_size, force_copy=False,
                                eps=eps)
    out_b = jax.block_until_ready(out_b)
    ref_b = _reference(scores.astype(jnp.bfloat16).astype(jnp.float32), align,
                       target, vocab_size=vocab_size, force_copy=False,
                       eps=eps)
    assert jnp.allclose(out_b, ref_b, rtol=1e-2, atol=1e-2)  # bf16 ulp slack

    # ---------- Test B: V % 128 == 0 -> DMA-gather path (+ streaming check) -
    vs_b, cv_b = 400, 112
    Nb, Vb = 24, vs_b + cv_b                      # V = 512, N not mult of 16
    kb1, kb2, kb3 = jax.random.split(jax.random.PRNGKey(1), 3)
    scores_b = jax.nn.softmax(jax.random.normal(kb1, (Nb, Vb), jnp.float32), -1)
    target_b = jax.random.randint(kb2, (Nb,), 0, vs_b, dtype=jnp.int32)
    align_b = jax.random.randint(kb3, (Nb,), 0, cv_b, dtype=jnp.int32)
    target_b = target_b.at[0].set(0)              # unk target
    align_b = align_b.at[1].set(0)                # unk align -> copy prob = 0
    target_b = target_b.at[2].set(1)              # masked row (ignore_index=1)

    for fc in (False, True):
        ref_g = _reference(scores_b, align_b, target_b, vocab_size=vs_b,
                           force_copy=fc, unk_index=0, ignore_index=1, eps=eps)
        out_g = know_generator_loss(scores_b, align_b, target_b,
                                    vocab_size=vs_b, force_copy=fc,
                                    unk_index=0, ignore_index=1, eps=eps)
        out_g = jax.block_until_ready(out_g)      # auto -> gather path
        assert jnp.allclose(out_g, ref_g, rtol=1e-5, atol=1e-5), fc
        out_s = know_generator_loss(scores_b, align_b, target_b,
                                    vocab_size=vs_b, force_copy=fc,
                                    unk_index=0, ignore_index=1, eps=eps,
                                    use_gather=False)  # streaming cross-check
        out_s = jax.block_until_ready(out_s)
        assert jnp.allclose(out_s, ref_g, rtol=1e-5, atol=1e-5), fc

    # ---------- Test C: ragged N / V, multi-step vocab axis (streaming) -----
    vs_c, cv_c = 200, 100
    Nc, Vc = 20, vs_c + cv_c                      # 20 % 8 != 0, 300 % 128 != 0
    kc1, kc2, kc3 = jax.random.split(jax.random.PRNGKey(2), 3)
    scores_c = jax.nn.softmax(jax.random.normal(kc1, (Nc, Vc), jnp.float32), -1)
    target_c = jax.random.randint(kc2, (Nc,), 0, vs_c, dtype=jnp.int32)
    align_c = jax.random.randint(kc3, (Nc,), 0, cv_c, dtype=jnp.int32)
    target_c = target_c.at[0].set(0)
    align_c = align_c.at[1].set(0)
    target_c = target_c.at[2].set(1)

    for fc in (False, True):
        out_c = know_generator_loss(scores_c, align_c, target_c,
                                    vocab_size=vs_c, force_copy=fc,
                                    unk_index=0, ignore_index=1, eps=eps,
                                    tile_n=8, tile_v=128)
        out_c = jax.block_until_ready(out_c)
        ref_c = _reference(scores_c, align_c, target_c, vocab_size=vs_c,
                           force_copy=fc, unk_index=0, ignore_index=1, eps=eps)
        assert jnp.allclose(out_c, ref_c, rtol=1e-5, atol=1e-5), fc

    print("KERNEL_OK")
</pallas_src>

<mosaic_0001>
module attributes {stable_mosaic.version = 11 : i64} {
  func.func @_know_gen_stream_kernel(%arg0: i32, %arg1: i32, %arg2: memref<8x1xi32, #tpu.memory_space<vmem>>, %arg3: memref<8x1xi32, #tpu.memory_space<vmem>>, %arg4: memref<8x1xi32, #tpu.memory_space<vmem>>, %arg5: memref<8x48xf32, #tpu.memory_space<vmem>>, %arg6: memref<8x1xf32, #tpu.memory_space<vmem>>, %arg7: memref<8x1xf32, #tpu.memory_space<vmem>>) attributes {dimension_semantics = [#tpu.dimension_semantics<parallel>, #tpu.dimension_semantics<arbitrary>], iteration_bounds = array<i64: 2, 1>, scalar_prefetch = 0 : i64, scratch_operands = 1 : i64, tpu.core_type = #tpu.core_type<tc>, window_params = [{transform_indices = @transform_0, window_bounds = array<i64: 8, 1>}, {transform_indices = @transform_1, window_bounds = array<i64: 8, 1>}, {transform_indices = @transform_2, window_bounds = array<i64: 8, 1>}, {transform_indices = @transform_3, window_bounds = array<i64: 8, 48>}, {transform_indices = @transform_4, window_bounds = array<i64: 8, 1>}]} {
    %c0_i32 = arith.constant 0 : i32
    %0 = arith.cmpi eq, %arg1, %c0_i32 : i32
    %1 = arith.extui %0 : i1 to i32
    %c0_i32_0 = arith.constant 0 : i32
    %2 = arith.cmpi ne, %1, %c0_i32_0 : i32
    scf.if %2 {
      %cst_14 = arith.constant 0.000000e+00 : f32
      %29 = vector.broadcast %cst_14 : f32 to vector<8x1xf32>
      %c0_15 = arith.constant 0 : index
      %c0_16 = arith.constant 0 : index
      %30 = vector.load %arg7[%c0_15, %c0_16] : memref<8x1xf32, #tpu.memory_space<vmem>>, vector<8x1xf32>
      tpu.vector_store %arg7[%c0_15, %c0_16], %29 {strides = array<i32>} : memref<8x1xf32, #tpu.memory_space<vmem>>, vector<8x1xf32>,
    } else {
    }
    %c0 = arith.constant 0 : index
    %c0_1 = arith.constant 0 : index
    %3 = vector.load %arg5[%c0, %c0_1] : memref<8x48xf32, #tpu.memory_space<vmem>>, vector<8x48xf32>
    %4 = tpu.iota {dimensions = array<i32: 1>} : vector<8x48xi32>
    %c48_i32 = arith.constant 48 : i32
    %5 = arith.muli %arg1, %c48_i32 : i32
    %c0_2 = arith.constant 0 : index
    %c0_3 = arith.constant 0 : index
    %6 = vector.load %arg2[%c0_2, %c0_3] : memref<8x1xi32, #tpu.memory_space<vmem>>, vector<8x1xi32>
    %7 = vector.broadcast %5 : i32 to vector<8x1xi32>
    %8 = arith.subi %6, %7 : vector<8x1xi32>
    %c0_4 = arith.constant 0 : index
    %c0_5 = arith.constant 0 : index
    %9 = vector.load %arg3[%c0_4, %c0_5] : memref<8x1xi32, #tpu.memory_space<vmem>>, vector<8x1xi32>
    %10 = vector.broadcast %5 : i32 to vector<8x1xi32>
    %11 = arith.subi %9, %10 : vector<8x1xi32>
    %12 = vector.broadcast %8 : vector<8x1xi32> to vector<8x48xi32>
    %13 = arith.cmpi eq, %4, %12 : vector<8x48xi32>
    %cst = arith.constant 0.000000e+00 : f32
    %14 = vector.broadcast %cst : f32 to vector<8x48xf32>
    %15 = arith.select %13, %3, %14 : vector<8x48xi1>, vector<8x48xf32>
    %16 = vector.broadcast %11 : vector<8x1xi32> to vector<8x48xi32>
    %17 = arith.cmpi eq, %4, %16 : vector<8x48xi32>
    %cst_6 = arith.constant 0.000000e+00 : f32
    %18 = vector.broadcast %cst_6 : f32 to vector<8x48xf32>
    %19 = arith.select %17, %3, %18 : vector<8x48xi1>, vector<8x48xf32>
    %20 = arith.addf %15, %19 : vector<8x48xf32>
    %c0_7 = arith.constant 0 : index
    %c0_8 = arith.constant 0 : index
    %21 = vector.load %arg7[%c0_7, %c0_8] : memref<8x1xf32, #tpu.memory_space<vmem>>, vector<8x1xf32>
    %cst_9 = arith.constant dense<0.000000e+00> : vector<8xf32>
    %22 = vector.multi_reduction <add>, %20, %cst_9 [1] : vector<8x48xf32> to vector<8xf32>
    %23 = vector.shape_cast %22 : vector<8xf32> to vector<8x1xf32>
    %24 = arith.addf %21, %23 : vector<8x1xf32>
    %c0_10 = arith.constant 0 : index
    %c0_11 = arith.constant 0 : index
    %25 = vector.load %arg7[%c0_10, %c0_11] : memref<8x1xf32, #tpu.memory_space<vmem>>, vector<8x1xf32>
    tpu.vector_store %arg7[%c0_10, %c0_11], %24 {strides = array<i32>} : memref<8x1xf32, #tpu.memory_space<vmem>>, vector<8x1xf32>,
    %c0_i32_12 = arith.constant 0 : i32
    %26 = arith.cmpi eq, %arg1, %c0_i32_12 : i32
    %27 = arith.extui %26 : i1 to i32
    %c0_i32_13 = arith.constant 0 : i32
    %28 = arith.cmpi ne, %27, %c0_i32_13 : i32
    scf.if %28 {
      %c0_14 = arith.constant 0 : index
      %c0_15 = arith.constant 0 : index
      %29 = vector.load %arg7[%c0_14, %c0_15] : memref<8x1xf32, #tpu.memory_space<vmem>>, vector<8x1xf32>
      %cst_16 = arith.constant 9.99999968E-21 : f32
      %30 = vector.broadcast %cst_16 : f32 to vector<8x1xf32>
      %31 = arith.addf %29, %30 : vector<8x1xf32>
      %32 = math.log %31 : vector<8x1xf32>
      %cst_17 = arith.constant 0.000000e+00 : f32
      %33 = vector.broadcast %cst_17 : f32 to vector<8x1xf32>
      %34 = arith.subf %33, %32 : vector<8x1xf32>
      %c0_18 = arith.constant 0 : index
      %c0_19 = arith.constant 0 : index
      %35 = vector.load %arg4[%c0_18, %c0_19] : memref<8x1xi32, #tpu.memory_space<vmem>>, vector<8x1xi32>
      %c0_i32_20 = arith.constant 0 : i32
      %36 = vector.broadcast %c0_i32_20 : i32 to vector<8x1xi32>
      %37 = arith.cmpi ne, %35, %36 : vector<8x1xi32>
      %cst_21 = arith.constant 0.000000e+00 : f32
      %38 = vector.broadcast %cst_21 : f32 to vector<8x1xf32>
      %39 = arith.select %37, %38, %34 : vector<8x1xi1>, vector<8x1xf32>
      %c0_22 = arith.constant 0 : index
      %c0_23 = arith.constant 0 : index
      %40 = vector.load %arg6[%c0_22, %c0_23] : memref<8x1xf32, #tpu.memory_space<vmem>>, vector<8x1xf32>
      tpu.vector_store %arg6[%c0_22, %c0_23], %39 {strides = array<i32>} : memref<8x1xf32, #tpu.memory_space<vmem>>, vector<8x1xf32>,
    } else {
    }
    return
  }
  func.func @transform_0(%arg0: i32, %arg1: i32) -> (i32, i32) {
    %c0_i32 = arith.constant 0 : i32
    %c0_i32_0 = arith.constant 0 : i32
    return %arg0, %c0_i32 : i32, i32
  }
  func.func @transform_1(%arg0: i32, %arg1: i32) -> (i32, i32) {
    %c0_i32 = arith.constant 0 : i32
    %c0_i32_0 = arith.constant 0 : i32
    return %arg0, %c0_i32 : i32, i32
  }
  func.func @transform_2(%arg0: i32, %arg1: i32) -> (i32, i32) {
    %c0_i32 = arith.constant 0 : i32
    %c0_i32_0 = arith.constant 0 : i32
    return %arg0, %c0_i32 : i32, i32
  }
  func.func @transform_3(%arg0: i32, %arg1: i32) -> (i32, i32) {
    %c0_i32 = arith.constant 0 : i32
    return %arg0, %arg1 : i32, i32
  }
  func.func @transform_4(%arg0: i32, %arg1: i32) -> (i32, i32) {
    %c0_i32 = arith.constant 0 : i32
    %c0_i32_0 = arith.constant 0 : i32
    return %arg0, %c0_i32 : i32, i32
  }
}

</mosaic_0001>

<llo_original>
// kernel: tpu_custom_call.1
$region0: #{tpu_custom_call.1}
  #allocation0 [shape = 'u32[]', space=smem, size = 0x4, offset = 0x4, fixed_abs, tag = 'smem constant byte address 0x4 - core index']
  #allocation1 [shape = 'u32[144,128]{1,0:T(1,128)}', space=vmem, size = 0x12000, scoped, tag = 'internal scratch']
  #allocation2 [shape = 'f32[8,1]{1,0:T(8,128)}', space=vmem, size = 0x1000, scoped, tag = 'scratch operand']
  %s0 = inlined_call_operand.vmem [shape: s32[16,1], index: 0, kind: input, shape index: {}]
  %s1 = inlined_call_operand.vmem [shape: s32[16,1], index: 1, kind: input, shape index: {}]
  %s2 = inlined_call_operand.vmem [shape: s32[16,1], index: 2, kind: input, shape index: {}]
  %s3 = inlined_call_operand.vmem [shape: f32[16,48], index: 3, kind: input, shape index: {}]
  %s4 = inlined_call_operand.vmem [shape: f32[16,1], index: 4, kind: output, shape index: {}]
  %s5 = sld [smem:[#allocation0]]
  $region57: #{tpu_custom_call.1} parent=0
    _
  %s7 = ssub.s32 1, %s5
  %s8 = scalar_select 0, %s7, %s5
  loop: start=0, step=1, limit=4
  $region2: #{tpu_custom_call.1} parent=0 // loop_pre_header
    _
  $region3: #{tpu_custom_call.1} parent=0 // loop_header
    %s10 = sphi 0, %s14
    %p11 = scmp.ge.s32.totalorder %s10, 4
    %s17 = sphi 0, %s29
    %s18 = sphi 0, %s25
    %s19 = sphi 0, %s17
    %s20 = sphi 0, %s18
    %s21 = sphi 0, %s19
    %s22 = sphi 0, %s20
    %s32 = sphi 0, %s34
    %s35 = sphi 0, %s32
    %s36 = sphi 0, %s35
    %s52 = sphi 0, %s36
    %s58 = sphi 0, %s60
    %s61 = sphi 0, %s58
    %s62 = sphi 0, %s61
    %s78 = sphi 0, %s62
    %s84 = sphi 0, %s86
    %s87 = sphi 0, %s84
    %s88 = sphi 0, %s87
    %s104 = sphi 0, %s88
    %s112 = sphi 0, %s114
    %s115 = sphi 0, %s112
    %s116 = sphi 0, %s115
    %s132 = sphi 0, %s116
    %s138 = sphi 0, %s140
    %s141 = sphi 0, %s138
    %s142 = sphi 0, %s141
    %s158 = sphi 0, %s142
  $region4: #{tpu_custom_call.1} parent=0 // loop_header_branch
    %13 = sbr.rel (%p11) target = $region8
  $region5: #{tpu_custom_call.1} parent=0 // loop_body
    %s15 = ssub.s32 %s10, 1
    %s16 = ssub.s32 %s10, 2
    %s23 = sadd.s32 1, %s18
    %p24 = scmp.ge.s32.totalorder %s23, 1
    %s25 = scalar_select %p24, 0, %s23
    %s26 = sadd.s32 1, %s17
    %s27 = scalar_select %p24, %s26, %s17
    %p28 = scmp.ge.s32.totalorder %s27, 2
    %s29 = scalar_select %p28, 0, %s27
    %s30 = ssub.s32 %s17, %s29
    %p31 = scmp.eq.s32.totalorder %s30, 0
    %s33 = sadd.s32 %s32, 1
    %s34 = scalar_select %p31, %s32, %s33
    %p37 = pneg %p31
    %p38 = scmp.eq.s32.totalorder %s10, 1
    %p39 = por %p37, %p38
    %p40 = scmp.ne.s32.totalorder %s32, %s35
    %p41 = scmp.eq.s32.totalorder %s10, 0
    %p42 = por %p40, %p41
    %p43 = scmp.ne.s32.totalorder %s32, %s35
    %p44 = scmp.eq.s32.totalorder %s15, 1
    %p45 = por %p43, %p44
    %p46 = scmp.ne.s32.totalorder %s35, %s36
    %p47 = scmp.eq.s32.totalorder %s15, 0
    %p48 = por %p46, %p47
    %p49 = scmp.ne.s32.totalorder %s35, %s36
    %p50 = scmp.eq.s32.totalorder %s16, 1
    %p51 = por %p49, %p50
    %p53 = scmp.ne.s32.totalorder %s36, %s52
    %p54 = scmp.eq.s32.totalorder %s16, 0
    %p55 = por %p53, %p54
    %s56 = ssub.s32 %s17, %s29
    %p57 = scmp.eq.s32.totalorder %s56, 0
    %s59 = sadd.s32 %s58, 1
    %s60 = scalar_select %p57, %s58, %s59
    %p63 = pneg %p57
    %p64 = scmp.eq.s32.totalorder %s10, 1
    %p65 = por %p63, %p64
    %p66 = scmp.ne.s32.totalorder %s58, %s61
    %p67 = scmp.eq.s32.totalorder %s10, 0
    %p68 = por %p66, %p67
    %p69 = scmp.ne.s32.totalorder %s58, %s61
    %p70 = scmp.eq.s32.totalorder %s15, 1
    %p71 = por %p69, %p70
    %p72 = scmp.ne.s32.totalorder %s61, %s62
    %p73 = scmp.eq.s32.totalorder %s15, 0
    %p74 = por %p72, %p73
    %p75 = scmp.ne.s32.totalorder %s61, %s62
    %p76 = scmp.eq.s32.totalorder %s16, 1
    %p77 = por %p75, %p76
    %p79 = scmp.ne.s32.totalorder %s62, %s78
    %p80 = scmp.eq.s32.totalorder %s16, 0
    %p81 = por %p79, %p80
    %s82 = ssub.s32 %s17, %s29
    %p83 = scmp.eq.s32.totalorder %s82, 0
    %s85 = sadd.s32 %s84, 1
    %s86 = scalar_select %p83, %s84, %s85
    %p89 = pneg %p83
    %p90 = scmp.eq.s32.totalorder %s10, 1
    %p91 = por %p89, %p90
    %p92 = scmp.ne.s32.totalorder %s84, %s87
    %p93 = scmp.eq.s32.totalorder %s10, 0
    %p94 = por %p92, %p93
    %p95 = scmp.ne.s32.totalorder %s84, %s87
    %p96 = scmp.eq.s32.totalorder %s15, 1
    %p97 = por %p95, %p96
    %p98 = scmp.ne.s32.totalorder %s87, %s88
    %p99 = scmp.eq.s32.totalorder %s15, 0
    %p100 = por %p98, %p99
    %p101 = scmp.ne.s32.totalorder %s87, %s88
    %p102 = scmp.eq.s32.totalorder %s16, 1
    %p103 = por %p101, %p102
    %p105 = scmp.ne.s32.totalorder %s88, %s104
    %p106 = scmp.eq.s32.totalorder %s16, 0
    %p107 = por %p105, %p106
    %s108 = ssub.s32 %s17, %s29
    %s109 = ssub.s32 %s18, %s25
    %s110 = sor.u32 %s108, %s109
    %p111 = scmp.eq.s32.totalorder %s110, 0
    %s113 = sadd.s32 %s112, 1
    %s114 = scalar_select %p111, %s112, %s113
    %p117 = pneg %p111
    %p118 = scmp.eq.s32.totalorder %s10, 1
    %p119 = por %p117, %p118
    %p120 = scmp.ne.s32.totalorder %s112, %s115
    %p121 = scmp.eq.s32.totalorder %s10, 0
    %p122 = por %p120, %p121
    %p123 = scmp.ne.s32.totalorder %s112, %s115
    %p124 = scmp.eq.s32.totalorder %s15, 1
    %p125 = por %p123, %p124
    %p126 = scmp.ne.s32.totalorder %s115, %s116
    %p127 = scmp.eq.s32.totalorder %s15, 0
    %p128 = por %p126, %p127
    %p129 = scmp.ne.s32.totalorder %s115, %s116
    %p130 = scmp.eq.s32.totalorder %s16, 1
    %p131 = por %p129, %p130
    %p133 = scmp.ne.s32.totalorder %s116, %s132
    %p134 = scmp.eq.s32.totalorder %s16, 0
    %p135 = por %p133, %p134
    %s136 = ssub.s32 %s17, %s29
    %p137 = scmp.eq.s32.totalorder %s136, 0
    %s139 = sadd.s32 %s138, 1
    %s140 = scalar_select %p137, %s138, %s139
    %p143 = pneg %p137
    %p144 = scmp.eq.s32.totalorder %s10, 1
    %p145 = por %p143, %p144
    %p146 = scmp.ne.s32.totalorder %s138, %s141
    %p147 = scmp.eq.s32.totalorder %s10, 0
    %p148 = por %p146, %p147
    %p149 = scmp.ne.s32.totalorder %s138, %s141
    %p150 = scmp.eq.s32.totalorder %s15, 1
    %p151 = por %p149, %p150
    %p152 = scmp.ne.s32.totalorder %s141, %s142
    %p153 = scmp.eq.s32.totalorder %s15, 0
    %p154 = por %p152, %p153
    %p155 = scmp.ne.s32.totalorder %s141, %s142
    %p156 = scmp.eq.s32.totalorder %s16, 1
    %p157 = por %p155, %p156
    %p159 = scmp.ne.s32.totalorder %s142, %s158
    %p160 = scmp.eq.s32.totalorder %s16, 0
    %p161 = por %p159, %p160
    %p162 = scmp.le.s32.totalorder 1, %s10
    %p163 = scmp.lt.s32.totalorder %s10, 3
    %p164 = pnand %p162, %p163
    %p165 = pneg %p164
    // Predicated region
    $region9: #{tpu_custom_call.1} parent=5 // pred_check
      _
    $region10: #{tpu_custom_call.1} parent=5 // pred_check_branch
      %167 = sbr.rel (%p164) target = $region12
    $region11: #{tpu_custom_call.1} parent=5 // pred_region
      %s168 = ssub.s32 %s10, 1
    $region12: #{tpu_custom_call.1} parent=5 // pred_fallthru
      _
    %p169 = scmp.lt.s32.totalorder %s10, 2
    // Predicated region
    $region13: #{tpu_custom_call.1} parent=5 // pred_check
      %p170 = pneg %p169
    $region14: #{tpu_custom_call.1} parent=5 // pred_check_branch
      %172 = sbr.rel (%p170) target = $region16
    $region15: #{tpu_custom_call.1} parent=5 // pred_region
      // Predicated region
      $region17: #{tpu_custom_call.1} parent=15 // pred_check
        %p173 = pneg %p42
      $region18: #{tpu_custom_call.1} parent=15 // pred_check_branch
        %175 = sbr.rel (%p173) target = $region20
      $region19: #{tpu_custom_call.1} parent=15 // pred_region
        %p176 = scmp.lt.s32.totalorder %s17, 1
        %s177 = scalar_select %p176, %s17, 1
        %s178 = smul.addr %s177, 8
        %s179 = scalar_lea.vmem %s0, %s178
      $region20: #{tpu_custom_call.1} parent=15 // pred_fallthru
        _
      // Predicated region
      $region21: #{tpu_custom_call.1} parent=15 // pred_check
        %p180 = pneg %p68
      $region22: #{tpu_custom_call.1} parent=15 // pred_check_branch
        %182 = sbr.rel (%p180) target = $region24
      $region23: #{tpu_custom_call.1} parent=15 // pred_region
        %p183 = scmp.lt.s32.totalorder %s17, 1
        %s184 = scalar_select %p183, %s17, 1
        %s185 = smul.addr %s184, 8
        %s186 = scalar_lea.vmem %s1, %s185
      $region24: #{tpu_custom_call.1} parent=15 // pred_fallthru
        _
      // Predicated region
      $region25: #{tpu_custom_call.1} parent=15 // pred_check
        %p187 = pneg %p94
      $region26: #{tpu_custom_call.1} parent=15 // pred_check_branch
        %189 = sbr.rel (%p187) target = $region28
      $region27: #{tpu_custom_call.1} parent=15 // pred_region
        %p190 = scmp.lt.s32.totalorder %s17, 1
        %s191 = scalar_select %p190, %s17, 1
        %s192 = smul.addr %s191, 8
        %s193 = scalar_lea.vmem %s2, %s192
      $region28: #{tpu_custom_call.1} parent=15 // pred_fallthru
        _
      // Predicated region
      $region29: #{tpu_custom_call.1} parent=15 // pred_check
        %p194 = pneg %p122
      $region30: #{tpu_custom_call.1} parent=15 // pred_check_branch
        %196 = sbr.rel (%p194) target = $region32
      $region31: #{tpu_custom_call.1} parent=15 // pred_region
        %p197 = scmp.lt.s32.totalorder %s17, 1
        %s198 = scalar_select %p197, %s17, 1
        %p199 = scmp.lt.s32.totalorder %s18, 0
        %s200 = scalar_select %p199, %s18, 0
        %s201 = sadd.s32 %s200, %s198
        %s202 = smul.addr %s201, 8
        %s203 = scalar_lea.vmem %s3, %s202
      $region32: #{tpu_custom_call.1} parent=15 // pred_fallthru
        _
    $region16: #{tpu_custom_call.1} parent=5 // pred_fallthru
      _
    %p204 = scmp.le.s32.totalorder 1, %s10
    %p205 = scmp.lt.s32.totalorder %s10, 3
    %p206 = pnand %p204, %p205
    %p207 = pneg %p206
    // Predicated region
    $region33: #{tpu_custom_call.1} parent=5 // pred_check
      _
    $region34: #{tpu_custom_call.1} parent=5 // pred_check_branch
      %209 = sbr.rel (%p206) target = $region36
    $region35: #{tpu_custom_call.1} parent=5 // pred_region
      %s210 = ssub.s32 %s10, 1
      %p211 = scmp.lt.s32.totalorder %s19, 1
      %s212 = scalar_select %p211, %s19, 1
      %s213 = smul.addr %s212, 8
      %s214 = scalar_lea.vmem %s0, %s213
      %p215 = pneg %p48
      %p216 = pneg %p45
      %p217 = scmp.lt.s32.totalorder %s19, 1
      %s218 = scalar_select %p217, %s19, 1
      %s219 = smul.addr %s218, 8
      %s220 = scalar_lea.vmem %s1, %s219
      %p221 = pneg %p74
      %p222 = pneg %p71
      %p223 = scmp.lt.s32.totalorder %s19, 1
      %s224 = scalar_select %p223, %s19, 1
      %s225 = smul.addr %s224, 8
      %s226 = scalar_lea.vmem %s2, %s225
      %p227 = pneg %p100
      %p228 = pneg %p97
      %p229 = scmp.lt.s32.totalorder %s19, 1
      %s230 = scalar_select %p229, %s19, 1
      %p231 = scmp.lt.s32.totalorder %s20, 0
      %s232 = scalar_select %p231, %s20, 0
      %s233 = sadd.s32 %s232, %s230
      %s234 = smul.addr %s233, 8
      %s235 = scalar_lea.vmem %s3, %s234
      %p236 = pneg %p128
      %p237 = pneg %p125
      %p238 = pneg %p154
      %p239 = pneg %p151
      %p240 = scmp.lt.s32.totalorder %s19, 1
      %s241 = scalar_select %p240, %s19, 1
      %s242 = smul.addr %s241, 8
      %s243 = scalar_lea.vmem %s4, %s242
      %p244 = scmp.lt.s32.totalorder %s19, 1
      %s245 = scalar_select %p244, %s19, 1
      %s246 = smul.addr %s245, 8
      %s247 = scalar_lea.vmem %s0, %s246
      %p248 = scmp.lt.s32.totalorder %s19, 1
      %s249 = scalar_select %p248, %s19, 1
      %s250 = smul.addr %s249, 8
      %s251 = scalar_lea.vmem %s1, %s250
      %p252 = scmp.lt.s32.totalorder %s19, 1
      %s253 = scalar_select %p252, %s19, 1
      %s254 = smul.addr %s253, 8
      %s255 = scalar_lea.vmem %s2, %s254
      %p256 = scmp.lt.s32.totalorder %s19, 1
      %s257 = scalar_select %p256, %s19, 1
      %p258 = scmp.lt.s32.totalorder %s20, 0
      %s259 = scalar_select %p258, %s20, 0
      %s260 = sadd.s32 %s259, %s257
      %s261 = smul.addr %s260, 8
      %s262 = scalar_lea.vmem %s3, %s261
      %p263 = scmp.lt.s32.totalorder %s19, 1
      %s264 = scalar_select %p263, %s19, 1
      %s265 = smul.addr %s264, 8
      %s266 = scalar_lea.vmem %s4, %s265
      %p267 = scmp.eq.s32.totalorder %s20, 0
      // Predicated region
      $region37: #{tpu_custom_call.1} parent=35 // pred_check
        %p268 = pneg %p267
      $region38: #{tpu_custom_call.1} parent=35 // pred_check_branch
        %270 = sbr.rel (%p268) target = $region40
      $region39: #{tpu_custom_call.1} parent=35 // pred_region
        %vm271 = vcmask 7168
        %272 = vst.msk [vmem:[#allocation2] sm:$0xff] %vm271, 0.0
      $region40: #{tpu_custom_call.1} parent=35 // pred_fallthru
        _
      %v273 = vld [vmem:[%s262] sm:$0xff]
      %v274 = vlaneseq
      %v275 = vand.u32 %v274, 127
      %s276 = smul.u32 %s20, 48
      %v277 = vld [vmem:[%s247] sm:$0xff]
      %v278 = vstv %s276
      %v279 = vsub.s32 %v277, %v278
      %v280 = vld [vmem:[%s251] sm:$0xff]
      %v281 = vsub.s32 %v280, %v278
      %282 = vset.pattern.permute.xlu0 0
      %283 = vperm.xlu0 %282, %v279
      %v284 = vpop.permute.xlu0 %283
      %vm285 = vcmp.eq.s32.totalorder %v275, %v284
      %v286 = vsel %vm285, %v273, 0.0
      %287 = vset.pattern.permute.xlu0 0
      %288 = vperm.xlu0 %287, %v281
      %v289 = vpop.permute.xlu0 %288
      %vm290 = vcmp.eq.s32.totalorder %v275, %v289
      %v291 = vsel %vm290, %v273, 0.0
      %v292 = vadd.f32 %v286, %v291
      %v293 = vld [vmem:[#allocation2] sm:$0xff]
      %vm294 = vcmask 392192
      %v295 = vsel %vm294, %v292, 0.0
      %296 = vadd.xlane.f32.xlu0 %v295
      %v297 = vpop.xlane.xlu0 %296
      %v298 = vadd.f32 %v293, %v297
      %vm299 = vcmask 7168
      %300 = vst.msk [vmem:[#allocation2] sm:$0xff] %vm299, %v298
      // Predicated region
      $region41: #{tpu_custom_call.1} parent=35 // pred_check
        %p301 = pneg %p267
      $region42: #{tpu_custom_call.1} parent=35 // pred_check_branch
        %303 = sbr.rel (%p301) target = $region44
      $region43: #{tpu_custom_call.1} parent=35 // pred_region
        %v304 = vld [vmem:[#allocation2] sm:$0xff]
        %v305 = vadd.f32 %v304, 1e-20
        %v306 = vlog2.pop %v305
        %v307 = vmul.f32 %v306, 0.6931472
        %v308 = vsub.f32 0.0, %v307
        %v309 = vld [vmem:[%s255] sm:$0xff]
        %vm310 = vcmp.ne.s32.totalorder %v309, 0
        %v311 = vsel %vm310, 0.0, %v308
        %312 = vst.msk [vmem:[%s266] sm:$0xff] %vm299, %v311
      $region44: #{tpu_custom_call.1} parent=35 // pred_fallthru
        _
      %p313 = scmp.lt.s32.totalorder %s19, 1
      %s314 = scalar_select %p313, %s19, 1
      %s315 = smul.addr %s314, 8
      %s316 = scalar_lea.vmem %s4, %s315
      // Predicated region
      $region45: #{tpu_custom_call.1} parent=35 // pred_check
        %p317 = pneg %p151
      $region46: #{tpu_custom_call.1} parent=35 // pred_check_branch
        %319 = sbr.rel (%p317) target = $region48
      $region47: #{tpu_custom_call.1} parent=35 // pred_region
        _
      $region48: #{tpu_custom_call.1} parent=35 // pred_fallthru
        _
    $region36: #{tpu_custom_call.1} parent=5 // pred_fallthru
      _
    %p320 = scmp.le.s32.totalorder 2, %s10
    // Predicated region
    $region49: #{tpu_custom_call.1} parent=5 // pred_check
      %p321 = pneg %p320
    $region50: #{tpu_custom_call.1} parent=5 // pred_check_branch
      %323 = sbr.rel (%p321) target = $region52
    $region51: #{tpu_custom_call.1} parent=5 // pred_region
      %s324 = ssub.s32 %s10, 2
      // Predicated region
      $region53: #{tpu_custom_call.1} parent=51 // pred_check
        %p325 = pneg %p157
      $region54: #{tpu_custom_call.1} parent=51 // pred_check_branch
        %327 = sbr.rel (%p325) target = $region56
      $region55: #{tpu_custom_call.1} parent=51 // pred_region
        %p328 = scmp.lt.s32.totalorder %s21, 1
        %s329 = scalar_select %p328, %s21, 1
        %s330 = smul.addr %s329, 8
        %s331 = scalar_lea.vmem %s4, %s330
      $region56: #{tpu_custom_call.1} parent=51 // pred_fallthru
        _
    $region52: #{tpu_custom_call.1} parent=5 // pred_fallthru
      _
  $region6: #{tpu_custom_call.1} parent=0 // loop_footer
    %s14 = sadd.s32 1, %s10
  $region7: #{tpu_custom_call.1} parent=0 // loop_footer_branch
    %9 = sbr.rel target = $region3
  $region8: #{tpu_custom_call.1} parent=0 // loop_exit
    _

</llo_original>
